<compile_context>
chip_gen: v7x
topology: tpu7x:2x2x1
jax: 0.10.0
libtpu: 0.0.40
codegen_flags: <defaults>
</compile_context>

<pallas_src>
import functools

import jax
import jax.numpy as jnp
from jax.experimental import pallas as pl
from jax.experimental.pallas import tpu as pltpu

BN_EPS = 1e-5
_MAX_ROW_TILE = 512            # cap on rows (2D) / samples (3D) per grid step
_TARGET_BLOCK_BYTES = 2 * 1024 * 1024   # ~2 MiB per f32 block


def _pick_tile(n, row_elems):
    """Rows per grid step: ~2 MiB per f32 block, multiple of 8, capped."""
    tile = _TARGET_BLOCK_BYTES // max(1, row_elems * 4)
    tile = max(8, min(_MAX_ROW_TILE, (tile // 8) * 8))
    return n if n <= tile else tile


# --------------------------- 2D (N, C) kernels ---------------------------

def _stats2d_kernel(x_ref, g_ref, b_ref,
                    scale_ref, shift_ref, mean_ref, var_ref,
                    sum_ref, sq_ref, *, n_rows, tile_rows, ragged):
    """Phase 1: accumulate per-channel sum / sumsq, fold affine at the end."""
    i = pl.program_id(0)

    @pl.when(i == 0)
    def _init():
        sum_ref[...] = jnp.zeros_like(sum_ref)
        sq_ref[...] = jnp.zeros_like(sq_ref)

    x = x_ref[...].astype(jnp.float32)                        # (tile_rows, C)
    if ragged:
        row = i * tile_rows + jax.lax.broadcasted_iota(jnp.int32, x.shape, 0)
        x = jnp.where(row < n_rows, x, 0.0)
    sum_ref[...] += jnp.sum(x, axis=0, keepdims=True)
    sq_ref[...] += jnp.sum(x * x, axis=0, keepdims=True)

    @pl.when(i == pl.num_programs(0) - 1)
    def _finalize():
        inv_n = 1.0 / n_rows
        mean = sum_ref[...] * inv_n
        var = jnp.maximum(sq_ref[...] * inv_n - mean * mean, 0.0)  # biased
        scale = g_ref[...] * jax.lax.rsqrt(var + BN_EPS)
        scale_ref[...] = scale
        shift_ref[...] = b_ref[...] - mean * scale
        mean_ref[...] = mean
        var_ref[...] = var


def _apply2d_kernel(x_ref, scale_ref, shift_ref, o_ref):
    """Phase 2 / eval: single per-element FMA, native output dtype."""
    x = x_ref[...].astype(jnp.float32)
    o_ref[...] = (x * scale_ref[...] + shift_ref[...]).astype(o_ref.dtype)


# ------------------------- 3D (N, C, L) kernels --------------------------

def _stats3d_kernel(x_ref, g_ref, b_ref,
                    scale_ref, shift_ref, mean_ref, var_ref,
                    sum_ref, sq_ref, *, count, n_rows, tile_rows, ragged):
    i = pl.program_id(0)

    @pl.when(i == 0)
    def _init():
        sum_ref[...] = jnp.zeros_like(sum_ref)
        sq_ref[...] = jnp.zeros_like(sq_ref)

    x = x_ref[...].astype(jnp.float32)                        # (tile, C, L)
    if ragged:
        row = i * tile_rows + jax.lax.broadcasted_iota(jnp.int32, x.shape, 0)
        x = jnp.where(row < n_rows, x, 0.0)
    s = jnp.sum(x, axis=2, keepdims=True)                     # (tile, C, 1)
    q = jnp.sum(x * x, axis=2, keepdims=True)
    sum_ref[...] += jnp.sum(s, axis=0, keepdims=True)         # (1, C, 1)
    sq_ref[...] += jnp.sum(q, axis=0, keepdims=True)

    @pl.when(i == pl.num_programs(0) - 1)
    def _finalize():
        inv_n = 1.0 / count
        mean = sum_ref[...] * inv_n
        var = jnp.maximum(sq_ref[...] * inv_n - mean * mean, 0.0)
        scale = g_ref[...] * jax.lax.rsqrt(var + BN_EPS)
        scale_ref[...] = scale
        shift_ref[...] = b_ref[...] - mean * scale
        mean_ref[...] = mean
        var_ref[...] = var


def _apply3d_kernel(x_ref, scale_ref, shift_ref, o_ref):
    x = x_ref[...].astype(jnp.float32)                        # (tile, C, L)
    o_ref[...] = (x * scale_ref[...] + shift_ref[...]).astype(o_ref.dtype)


# ------------------------------ wrappers ---------------------------------

_PARALLEL = pltpu.CompilerParams(dimension_semantics=("parallel",))
_ARBITRARY = pltpu.CompilerParams(dimension_semantics=("arbitrary",))


def _bn2d(x, gamma, beta, running_mean, running_var, training):
    n, c = x.shape
    g = gamma.reshape(1, c).astype(jnp.float32)
    b = beta.reshape(1, c).astype(jnp.float32)
    stat_spec = pl.BlockSpec((1, c), lambda i: (0, 0))
    tile = _pick_tile(n, c)
    n_tiles = pl.cdiv(n, tile)

    if training:
        ragged = (n_tiles * tile) != n
        scale, shift, mean, var = pl.pallas_call(
            functools.partial(_stats2d_kernel, n_rows=n, tile_rows=tile,
                              ragged=ragged),
            out_shape=[jax.ShapeDtypeStruct((1, c), jnp.float32)] * 4,
            grid=(n_tiles,),
            in_specs=[pl.BlockSpec((tile, c), lambda i: (i, 0)),
                      stat_spec, stat_spec],
            out_specs=[stat_spec] * 4,
            scratch_shapes=[pltpu.VMEM((1, c), jnp.float32),
                            pltpu.VMEM((1, c), jnp.float32)],
            compiler_params=_ARBITRARY,
        )(x, g, b)
    else:
        rv = running_var.reshape(1, c).astype(jnp.float32)
        rm = running_mean.reshape(1, c).astype(jnp.float32)
        scale = g * jax.lax.rsqrt(rv + BN_EPS)     # tiny (1,C) XLA math
        shift = b - rm * scale
        mean = var = None

    y = pl.pallas_call(
        _apply2d_kernel,
        out_shape=jax.ShapeDtypeStruct((n, c), x.dtype),
        grid=(n_tiles,),
        in_specs=[pl.BlockSpec((tile, c), lambda i: (i, 0)),
                  stat_spec, stat_spec],
        out_specs=pl.BlockSpec((tile, c), lambda i: (i, 0)),
        compiler_params=_PARALLEL,
    )(x, scale, shift)
    return y, mean, var


def _bn3d(x, gamma, beta, running_mean, running_var, training):
    n, c, l = x.shape
    g = gamma.reshape(1, c, 1).astype(jnp.float32)
    b = beta.reshape(1, c, 1).astype(jnp.float32)
    stat_spec = pl.BlockSpec((1, c, 1), lambda i: (0, 0, 0))
    tile = _pick_tile(n, c * l)
    n_tiles = pl.cdiv(n, tile)

    if training:
        ragged = (n_tiles * tile) != n
        scale, shift, mean, var = pl.pallas_call(
            functools.partial(_stats3d_kernel, count=n * l, n_rows=n,
                              tile_rows=tile, ragged=ragged),
            out_shape=[jax.ShapeDtypeStruct((1, c, 1), jnp.float32)] * 4,
            grid=(n_tiles,),
            in_specs=[pl.BlockSpec((tile, c, l), lambda i: (i, 0, 0)),
                      stat_spec, stat_spec],
            out_specs=[stat_spec] * 4,
            scratch_shapes=[pltpu.VMEM((1, c, 1), jnp.float32),
                            pltpu.VMEM((1, c, 1), jnp.float32)],
            compiler_params=_ARBITRARY,
        )(x, g, b)
    else:
        rv = running_var.reshape(1, c, 1).astype(jnp.float32)
        rm = running_mean.reshape(1, c, 1).astype(jnp.float32)
        scale = g * jax.lax.rsqrt(rv + BN_EPS)
        shift = b - rm * scale
        mean = var = None

    y = pl.pallas_call(
        _apply3d_kernel,
        out_shape=jax.ShapeDtypeStruct((n, c, l), x.dtype),
        grid=(n_tiles,),
        in_specs=[pl.BlockSpec((tile, c, l), lambda i: (i, 0, 0)),
                  stat_spec, stat_spec],
        out_specs=pl.BlockSpec((tile, c, l), lambda i: (i, 0, 0)),
        compiler_params=_PARALLEL,
    )(x, scale, shift)
    return y, mean, var


@functools.partial(jax.jit,
                   static_argnames=("training", "momentum",
                                    "return_running_stats"))
def batchnorm1d(x, gamma, beta, running_mean, running_var, *,
                training=True, momentum=0.1, return_running_stats=False):
    """Forward of the PyTorch `BatchNorm` module (nn.BatchNorm1d(dim))."""
    if x.ndim == 2:                       # (N, C)
        y, mean, var = _bn2d(x, gamma, beta, running_mean, running_var,
                             training)
        count = x.shape[0]
    elif x.ndim == 3:                     # (N, C, L): stats over N and L
        y, mean, var = _bn3d(x, gamma, beta, running_mean, running_var,
                             training)
        count = x.shape[0] * x.shape[2]
    else:
        raise ValueError("BatchNorm1d expects (N, C) or (N, C, L) input")

    if not return_running_stats:
        return y

    if training:
        # PyTorch buffer update: EMA with momentum, *unbiased* batch variance.
        unbiased = var.reshape(-1) * (count / max(count - 1, 1))
        new_rm = (1.0 - momentum) * running_mean + momentum * mean.reshape(-1)
        new_rv = (1.0 - momentum) * running_var + momentum * unbiased
        return y, new_rm, new_rv
    # TODO(synk): eval mode leaves running stats untouched (matches PyTorch).
    return y, running_mean, running_var


# -------------------------------- main ------------------------------------

if __name__ == "__main__":
    n, dim, l = 16, 128, 8
    key = jax.random.PRNGKey(0)
    kx2, kx3 = jax.random.split(key, 2)

    x2d = jax.random.normal(kx2, (n, dim), jnp.float32)
    x3d = jax.random.normal(kx3, (2, dim, l), jnp.float32)

    # weights_init_kaiming on BatchNorm1d: weight (gamma)=1, bias (beta)=0.
    gamma = jnp.ones((dim,), jnp.float32)
    beta = jnp.zeros((dim,), jnp.float32)
    running_mean = jnp.zeros((dim,), jnp.float32)
    running_var = jnp.ones((dim,), jnp.float32)

    # Default PyTorch module state is training mode -> batch statistics.
    y_train, new_rm, new_rv = batchnorm1d(
        x2d, gamma, beta, running_mean, running_var,
        training=True, return_running_stats=True)
    y_eval = batchnorm1d(x2d, gamma, beta, running_mean, running_var,
                         training=False)
    y_3d = batchnorm1d(x3d, gamma, beta, running_mean, running_var,
                       training=True)
    y_bf16 = batchnorm1d(x2d.astype(jnp.bfloat16), gamma, beta,
                         running_mean, running_var, training=True)
    jax.block_until_ready((y_train, y_eval, y_3d, y_bf16, new_rm, new_rv))

    # pure-JAX references
    mu = jnp.mean(x2d, axis=0, keepdims=True)
    var_b = jnp.mean((x2d - mu) ** 2, axis=0, keepdims=True)
    ref_train = (x2d - mu) * jax.lax.rsqrt(var_b + BN_EPS) * gamma + beta
    ref_eval = (x2d - running_mean) * jax.lax.rsqrt(running_var + BN_EPS) \
        * gamma + beta
    ref_rm = 0.9 * running_mean + 0.1 * mu.reshape(-1)
    ref_rv = 0.9 * running_var + 0.1 * var_b.reshape(-1) * n / (n - 1)

    mu3 = jnp.mean(x3d, axis=(0, 2), keepdims=True)
    var3 = jnp.mean((x3d - mu3) ** 2, axis=(0, 2), keepdims=True)
    ref_3d = ((x3d - mu3) * jax.lax.rsqrt(var3 + BN_EPS)
              * gamma[None, :, None] + beta[None, :, None])

    assert y_train.shape == (n, dim) and y_eval.shape == (n, dim)
    assert y_3d.shape == (2, dim, l)
    assert y_bf16.dtype == jnp.bfloat16
    assert bool(jnp.all(jnp.isfinite(y_train)))
    assert bool(jnp.all(jnp.isfinite(y_eval)))
    assert bool(jnp.all(jnp.isfinite(y_3d)))
    assert bool(jnp.allclose(y_train, ref_train, atol=1e-5, rtol=1e-5))
    assert bool(jnp.allclose(y_eval, ref_eval, atol=1e-5, rtol=1e-5))
    assert bool(jnp.allclose(y_3d, ref_3d, atol=1e-5, rtol=1e-5))
    assert bool(jnp.allclose(new_rm, ref_rm, atol=1e-5, rtol=1e-5))
    assert bool(jnp.allclose(new_rv, ref_rv, atol=1e-5, rtol=1e-5))
    assert bool(jnp.allclose(y_bf16.astype(jnp.float32), ref_train,
                             atol=1e-1, rtol=1e-1))

    print("KERNEL_OK")
</pallas_src>

<mosaic_0001>
module attributes {stable_mosaic.version = 11 : i64} {
  func.func @_apply2d_kernel(%arg0: i32, %arg1: memref<16x128xf32, #tpu.memory_space<vmem>>, %arg2: memref<1x128xf32, #tpu.memory_space<vmem>>, %arg3: memref<1x128xf32, #tpu.memory_space<vmem>>, %arg4: memref<16x128xf32, #tpu.memory_space<vmem>>) attributes {dimension_semantics = [#tpu.dimension_semantics<parallel>], iteration_bounds = array<i64: 1>, scalar_prefetch = 0 : i64, scratch_operands = 0 : i64, tpu.core_type = #tpu.core_type<tc>, window_params = [{transform_indices = @transform_0, window_bounds = array<i64: 16, 128>}, {pipeline_mode = #tpu.pipeline_mode<synchronous>, transform_indices = @transform_1, window_bounds = array<i64: 1, 128>}, {pipeline_mode = #tpu.pipeline_mode<synchronous>, transform_indices = @transform_2, window_bounds = array<i64: 1, 128>}, {transform_indices = @transform_3, window_bounds = array<i64: 16, 128>}]} {
    %c0 = arith.constant 0 : index
    %c0_0 = arith.constant 0 : index
    %0 = vector.load %arg1[%c0, %c0_0] : memref<16x128xf32, #tpu.memory_space<vmem>>, vector<16x128xf32>
    %c0_1 = arith.constant 0 : index
    %c0_2 = arith.constant 0 : index
    %1 = vector.load %arg2[%c0_1, %c0_2] : memref<1x128xf32, #tpu.memory_space<vmem>>, vector<1x128xf32>
    %2 = vector.broadcast %1 : vector<1x128xf32> to vector<16x128xf32>
    %3 = arith.mulf %0, %2 : vector<16x128xf32>
    %c0_3 = arith.constant 0 : index
    %c0_4 = arith.constant 0 : index
    %4 = vector.load %arg3[%c0_3, %c0_4] : memref<1x128xf32, #tpu.memory_space<vmem>>, vector<1x128xf32>
    %5 = vector.broadcast %4 : vector<1x128xf32> to vector<16x128xf32>
    %6 = arith.addf %3, %5 : vector<16x128xf32>
    %c0_5 = arith.constant 0 : index
    %c0_6 = arith.constant 0 : index
    %7 = vector.load %arg4[%c0_5, %c0_6] : memref<16x128xf32, #tpu.memory_space<vmem>>, vector<16x128xf32>
    tpu.vector_store %arg4[%c0_5, %c0_6], %6 {strides = array<i32>} : memref<16x128xf32, #tpu.memory_space<vmem>>, vector<16x128xf32>,
    return
  }
  func.func @transform_0(%arg0: i32) -> (i32, i32) {
    %c0_i32 = arith.constant 0 : i32
    %c0_i32_0 = arith.constant 0 : i32
    return %arg0, %c0_i32 : i32, i32
  }
  func.func @transform_1(%arg0: i32) -> (i32, i32) {
    %c0_i32 = arith.constant 0 : i32
    %c0_i32_0 = arith.constant 0 : i32
    %c0_i32_1 = arith.constant 0 : i32
    return %c0_i32, %c0_i32_0 : i32, i32
  }
  func.func @transform_2(%arg0: i32) -> (i32, i32) {
    %c0_i32 = arith.constant 0 : i32
    %c0_i32_0 = arith.constant 0 : i32
    %c0_i32_1 = arith.constant 0 : i32
    return %c0_i32, %c0_i32_0 : i32, i32
  }
  func.func @transform_3(%arg0: i32) -> (i32, i32) {
    %c0_i32 = arith.constant 0 : i32
    %c0_i32_0 = arith.constant 0 : i32
    return %arg0, %c0_i32 : i32, i32
  }
}

module attributes {stable_mosaic.version = 11 : i64} {
  func.func @_stats2d_kernel(%arg0: i32, %arg1: memref<16x128xf32, #tpu.memory_space<vmem>>, %arg2: memref<1x128xf32, #tpu.memory_space<vmem>>, %arg3: memref<1x128xf32, #tpu.memory_space<vmem>>, %arg4: memref<1x128xf32, #tpu.memory_space<vmem>>, %arg5: memref<1x128xf32, #tpu.memory_space<vmem>>, %arg6: memref<1x128xf32, #tpu.memory_space<vmem>>, %arg7: memref<1x128xf32, #tpu.memory_space<vmem>>, %arg8: memref<1x128xf32, #tpu.memory_space<vmem>>, %arg9: memref<1x128xf32, #tpu.memory_space<vmem>>) attributes {dimension_semantics = [#tpu.dimension_semantics<arbitrary>], iteration_bounds = array<i64: 1>, scalar_prefetch = 0 : i64, scratch_operands = 2 : i64, tpu.core_type = #tpu.core_type<tc>, window_params = [{transform_indices = @transform_0, window_bounds = array<i64: 16, 128>}, {pipeline_mode = #tpu.pipeline_mode<synchronous>, transform_indices = @transform_1, window_bounds = array<i64: 1, 128>}, {pipeline_mode = #tpu.pipeline_mode<synchronous>, transform_indices = @transform_2, window_bounds = array<i64: 1, 128>}, {pipeline_mode = #tpu.pipeline_mode<synchronous>, transform_indices = @transform_3, window_bounds = array<i64: 1, 128>}, {pipeline_mode = #tpu.pipeline_mode<synchronous>, transform_indices = @transform_4, window_bounds = array<i64: 1, 128>}, {pipeline_mode = #tpu.pipeline_mode<synchronous>, transform_indices = @transform_5, window_bounds = array<i64: 1, 128>}, {pipeline_mode = #tpu.pipeline_mode<synchronous>, transform_indices = @transform_6, window_bounds = array<i64: 1, 128>}]} {
    %c0_i32 = arith.constant 0 : i32
    %0 = arith.cmpi eq, %arg0, %c0_i32 : i32
    %1 = arith.extui %0 : i1 to i32
    %c0_i32_0 = arith.constant 0 : i32
    %2 = arith.cmpi ne, %1, %c0_i32_0 : i32
    scf.if %2 {
      %cst_13 = arith.constant 0.000000e+00 : f32
      %18 = vector.broadcast %cst_13 : f32 to vector<1x128xf32>
      %c0_14 = arith.constant 0 : index
      %c0_15 = arith.constant 0 : index
      %19 = vector.load %arg8[%c0_14, %c0_15] : memref<1x128xf32, #tpu.memory_space<vmem>>, vector<1x128xf32>
      tpu.vector_store %arg8[%c0_14, %c0_15], %18 {strides = array<i32>} : memref<1x128xf32, #tpu.memory_space<vmem>>, vector<1x128xf32>,
      %cst_16 = arith.constant 0.000000e+00 : f32
      %20 = vector.broadcast %cst_16 : f32 to vector<1x128xf32>
      %c0_17 = arith.constant 0 : index
      %c0_18 = arith.constant 0 : index
      %21 = vector.load %arg9[%c0_17, %c0_18] : memref<1x128xf32, #tpu.memory_space<vmem>>, vector<1x128xf32>
      tpu.vector_store %arg9[%c0_17, %c0_18], %20 {strides = array<i32>} : memref<1x128xf32, #tpu.memory_space<vmem>>, vector<1x128xf32>,
    } else {
    }
    %c0 = arith.constant 0 : index
    %c0_1 = arith.constant 0 : index
    %3 = vector.load %arg1[%c0, %c0_1] : memref<16x128xf32, #tpu.memory_space<vmem>>, vector<16x128xf32>
    %c0_2 = arith.constant 0 : index
    %c0_3 = arith.constant 0 : index
    %4 = vector.load %arg8[%c0_2, %c0_3] : memref<1x128xf32, #tpu.memory_space<vmem>>, vector<1x128xf32>
    %cst = arith.constant dense<0.000000e+00> : vector<128xf32>
    %5 = vector.multi_reduction <add>, %3, %cst [0] : vector<16x128xf32> to vector<128xf32>
    %6 = vector.shape_cast %5 : vector<128xf32> to vector<1x128xf32>
    %7 = arith.addf %4, %6 : vector<1x128xf32>
    %c0_4 = arith.constant 0 : index
    %c0_5 = arith.constant 0 : index
    %8 = vector.load %arg8[%c0_4, %c0_5] : memref<1x128xf32, #tpu.memory_space<vmem>>, vector<1x128xf32>
    tpu.vector_store %arg8[%c0_4, %c0_5], %7 {strides = array<i32>} : memref<1x128xf32, #tpu.memory_space<vmem>>, vector<1x128xf32>,
    %c0_6 = arith.constant 0 : index
    %c0_7 = arith.constant 0 : index
    %9 = vector.load %arg9[%c0_6, %c0_7] : memref<1x128xf32, #tpu.memory_space<vmem>>, vector<1x128xf32>
    %10 = arith.mulf %3, %3 : vector<16x128xf32>
    %cst_8 = arith.constant dense<0.000000e+00> : vector<128xf32>
    %11 = vector.multi_reduction <add>, %10, %cst_8 [0] : vector<16x128xf32> to vector<128xf32>
    %12 = vector.shape_cast %11 : vector<128xf32> to vector<1x128xf32>
    %13 = arith.addf %9, %12 : vector<1x128xf32>
    %c0_9 = arith.constant 0 : index
    %c0_10 = arith.constant 0 : index
    %14 = vector.load %arg9[%c0_9, %c0_10] : memref<1x128xf32, #tpu.memory_space<vmem>>, vector<1x128xf32>
    tpu.vector_store %arg9[%c0_9, %c0_10], %13 {strides = array<i32>} : memref<1x128xf32, #tpu.memory_space<vmem>>, vector<1x128xf32>,
    %c0_i32_11 = arith.constant 0 : i32
    %15 = arith.cmpi eq, %arg0, %c0_i32_11 : i32
    %16 = arith.extui %15 : i1 to i32
    %c0_i32_12 = arith.constant 0 : i32
    %17 = arith.cmpi ne, %16, %c0_i32_12 : i32
    scf.if %17 {
      %c0_13 = arith.constant 0 : index
      %c0_14 = arith.constant 0 : index
      %18 = vector.load %arg8[%c0_13, %c0_14] : memref<1x128xf32, #tpu.memory_space<vmem>>, vector<1x128xf32>
      %cst_15 = arith.constant 6.250000e-02 : f32
      %19 = vector.broadcast %cst_15 : f32 to vector<1x128xf32>
      %20 = arith.mulf %18, %19 : vector<1x128xf32>
      %c0_16 = arith.constant 0 : index
      %c0_17 = arith.constant 0 : index
      %21 = vector.load %arg9[%c0_16, %c0_17] : memref<1x128xf32, #tpu.memory_space<vmem>>, vector<1x128xf32>
      %cst_18 = arith.constant 6.250000e-02 : f32
      %22 = vector.broadcast %cst_18 : f32 to vector<1x128xf32>
      %23 = arith.mulf %21, %22 : vector<1x128xf32>
      %24 = arith.mulf %20, %20 : vector<1x128xf32>
      %25 = arith.subf %23, %24 : vector<1x128xf32>
      %cst_19 = arith.constant 0.000000e+00 : f32
      %26 = vector.broadcast %cst_19 : f32 to vector<1x128xf32>
      %27 = arith.maximumf %25, %26 : vector<1x128xf32>
      %c0_20 = arith.constant 0 : index
      %c0_21 = arith.constant 0 : index
      %28 = vector.load %arg2[%c0_20, %c0_21] : memref<1x128xf32, #tpu.memory_space<vmem>>, vector<1x128xf32>
      %cst_22 = arith.constant 9.99999974E-6 : f32
      %29 = vector.broadcast %cst_22 : f32 to vector<1x128xf32>
      %30 = arith.addf %27, %29 : vector<1x128xf32>
      %31 = math.rsqrt %30 : vector<1x128xf32>
      %32 = arith.mulf %28, %31 : vector<1x128xf32>
      %c0_23 = arith.constant 0 : index
      %c0_24 = arith.constant 0 : index
      %33 = vector.load %arg4[%c0_23, %c0_24] : memref<1x128xf32, #tpu.memory_space<vmem>>, vector<1x128xf32>
      tpu.vector_store %arg4[%c0_23, %c0_24], %32 {strides = array<i32>} : memref<1x128xf32, #tpu.memory_space<vmem>>, vector<1x128xf32>,
      %c0_25 = arith.constant 0 : index
      %c0_26 = arith.constant 0 : index
      %34 = vector.load %arg3[%c0_25, %c0_26] : memref<1x128xf32, #tpu.memory_space<vmem>>, vector<1x128xf32>
      %35 = arith.mulf %20, %32 : vector<1x128xf32>
      %36 = arith.subf %34, %35 : vector<1x128xf32>
      %c0_27 = arith.constant 0 : index
      %c0_28 = arith.constant 0 : index
      %37 = vector.load %arg5[%c0_27, %c0_28] : memref<1x128xf32, #tpu.memory_space<vmem>>, vector<1x128xf32>
      tpu.vector_store %arg5[%c0_27, %c0_28], %36 {strides = array<i32>} : memref<1x128xf32, #tpu.memory_space<vmem>>, vector<1x128xf32>,
      %c0_29 = arith.constant 0 : index
      %c0_30 = arith.constant 0 : index
      %38 = vector.load %arg6[%c0_29, %c0_30] : memref<1x128xf32, #tpu.memory_space<vmem>>, vector<1x128xf32>
      tpu.vector_store %arg6[%c0_29, %c0_30], %20 {strides = array<i32>} : memref<1x128xf32, #tpu.memory_space<vmem>>, vector<1x128xf32>,
      %c0_31 = arith.constant 0 : index
      %c0_32 = arith.constant 0 : index
      %39 = vector.load %arg7[%c0_31, %c0_32] : memref<1x128xf32, #tpu.memory_space<vmem>>, vector<1x128xf32>
      tpu.vector_store %arg7[%c0_31, %c0_32], %27 {strides = array<i32>} : memref<1x128xf32, #tpu.memory_space<vmem>>, vector<1x128xf32>,
    } else {
    }
    return
  }
  func.func @transform_0(%arg0: i32) -> (i32, i32) {
    %c0_i32 = arith.constant 0 : i32
    %c0_i32_0 = arith.constant 0 : i32
    return %arg0, %c0_i32 : i32, i32
  }
  func.func @transform_1(%arg0: i32) -> (i32, i32) {
    %c0_i32 = arith.constant 0 : i32
    %c0_i32_0 = arith.constant 0 : i32
    %c0_i32_1 = arith.constant 0 : i32
    return %c0_i32, %c0_i32_0 : i32, i32
  }
  func.func @transform_2(%arg0: i32) -> (i32, i32) {
    %c0_i32 = arith.constant 0 : i32
    %c0_i32_0 = arith.constant 0 : i32
    %c0_i32_1 = arith.constant 0 : i32
    return %c0_i32, %c0_i32_0 : i32, i32
  }
  func.func @transform_3(%arg0: i32) -> (i32, i32) {
    %c0_i32 = arith.constant 0 : i32
    %c0_i32_0 = arith.constant 0 : i32
    %c0_i32_1 = arith.constant 0 : i32
    return %c0_i32, %c0_i32_0 : i32, i32
  }
  func.func @transform_4(%arg0: i32) -> (i32, i32) {
    %c0_i32 = arith.constant 0 : i32
    %c0_i32_0 = arith.constant 0 : i32
    %c0_i32_1 = arith.constant 0 : i32
    return %c0_i32, %c0_i32_0 : i32, i32
  }
  func.func @transform_5(%arg0: i32) -> (i32, i32) {
    %c0_i32 = arith.constant 0 : i32
    %c0_i32_0 = arith.constant 0 : i32
    %c0_i32_1 = arith.constant 0 : i32
    return %c0_i32, %c0_i32_0 : i32, i32
  }
  func.func @transform_6(%arg0: i32) -> (i32, i32) {
    %c0_i32 = arith.constant 0 : i32
    %c0_i32_0 = arith.constant 0 : i32
    %c0_i32_1 = arith.constant 0 : i32
    return %c0_i32, %c0_i32_0 : i32, i32
  }
}

</mosaic_0001>

<llo_original>
// kernel: batchnorm1d.2
$region0: #{batchnorm1d.2}
  #allocation0 [shape = 'u32[]', space=smem, size = 0x4, offset = 0x4, fixed_abs, tag = 'smem constant byte address 0x4 - core index']
  #allocation1 [shape = 'u32[144,128]{1,0:T(1,128)}', space=vmem, size = 0x12000, scoped, tag = 'internal scratch']
  #allocation2 [shape = 'f32[1,128]{1,0:T(1,128)}', space=vmem, size = 0x200, scoped, tag = 'scratch operand']
  #allocation3 [shape = 'f32[1,128]{1,0:T(1,128)}', space=vmem, size = 0x200, scoped, tag = 'scratch operand']
  %s0 = inlined_call_operand.vmem [shape: f32[16,128], index: 0, kind: input, shape index: {}]
  %s1 = inlined_call_operand.vmem [shape: f32[1,128], index: 1, kind: input, shape index: {}]
  %s2 = inlined_call_operand.vmem [shape: f32[1,128], index: 2, kind: input, shape index: {}]
  %s3 = inlined_call_operand.vmem [shape: f32[1,128], index: 3, kind: output, shape index: {0}]
  %s4 = inlined_call_operand.vmem [shape: f32[1,128], index: 4, kind: output, shape index: {1}]
  %s5 = inlined_call_operand.vmem [shape: f32[1,128], index: 5, kind: output, shape index: {2}]
  %s6 = inlined_call_operand.vmem [shape: f32[1,128], index: 6, kind: output, shape index: {3}]
  %7 = xla_tuple %s3, %s4, %s5, %s6
  %s8 = sld [smem:[#allocation0]]
  $region54: #{batchnorm1d.2} parent=0
    _
  %s10 = ssub.s32 1, %s8
  %s11 = scalar_select 0, %s10, %s8
  // Predicated region
  $region2: #{batchnorm1d.2} parent=0 // pred_check
    _
  $region3: #{batchnorm1d.2} parent=0 // pred_check_branch
    %13 = sbr.rel (0) target = $region5
  $region4: #{batchnorm1d.2} parent=0 // pred_region
    _
  $region5: #{batchnorm1d.2} parent=0 // pred_fallthru
    _
  // Predicated region
  $region6: #{batchnorm1d.2} parent=0 // pred_check
    _
  $region7: #{batchnorm1d.2} parent=0 // pred_check_branch
    %15 = sbr.rel (0) target = $region9
  $region8: #{batchnorm1d.2} parent=0 // pred_region
    _
  $region9: #{batchnorm1d.2} parent=0 // pred_fallthru
    _
  // Predicated region
  $region10: #{batchnorm1d.2} parent=0 // pred_check
    _
  $region11: #{batchnorm1d.2} parent=0 // pred_check_branch
    %17 = sbr.rel (0) target = $region13
  $region12: #{batchnorm1d.2} parent=0 // pred_region
    _
  $region13: #{batchnorm1d.2} parent=0 // pred_fallthru
    _
  %p18 = scmp.eq.s32.totalorder 0, 0
  // Predicated region
  $region14: #{batchnorm1d.2} parent=0 // pred_check
    %p19 = pneg %p18
  $region15: #{batchnorm1d.2} parent=0 // pred_check_branch
    %21 = sbr.rel (%p19) target = $region17
  $region16: #{batchnorm1d.2} parent=0 // pred_region
    %22 = vst [vmem:[#allocation2] sm:$0x1] 0.0
    %23 = vst [vmem:[#allocation3] sm:$0x1] 0.0
  $region17: #{batchnorm1d.2} parent=0 // pred_fallthru
    _
  %v24 = vld [vmem:[%s0] sm:$0xff]
  %v25 = vld [vmem:[%s0 + $0x8] sm:$0xff]
  %v26 = vld [vmem:[#allocation2] sm:$0x1]
  %v27 = vadd.f32 %v24, %v25
  %v28 = vrot.slane %v27, 4
  %v29 = vadd.f32 %v27, %v28
  %v30 = vrot.slane %v29, 2
  %v31 = vadd.f32 %v29, %v30
  %v32 = vrot.slane %v31, 1
  %v33 = vadd.f32 %v31, %v32
  %v34 = vadd.f32 %v26, %v33
  %35 = vst [vmem:[#allocation2] sm:$0x1] %v34
  %v36 = vld [vmem:[#allocation3] sm:$0x1]
  %v37 = vmul.f32 %v24, %v24
  %v38 = vmul.f32 %v25, %v25
  %v39 = vadd.f32 %v37, %v38
  %v40 = vrot.slane %v39, 4
  %v41 = vadd.f32 %v39, %v40
  %v42 = vrot.slane %v41, 2
  %v43 = vadd.f32 %v41, %v42
  %v44 = vrot.slane %v43, 1
  %v45 = vadd.f32 %v43, %v44
  %v46 = vadd.f32 %v36, %v45
  %47 = vst [vmem:[#allocation3] sm:$0x1] %v46
  // Predicated region
  $region18: #{batchnorm1d.2} parent=0 // pred_check
    %p48 = pneg %p18
  $region19: #{batchnorm1d.2} parent=0 // pred_check_branch
    %50 = sbr.rel (%p48) target = $region21
  $region20: #{batchnorm1d.2} parent=0 // pred_region
    %v51 = vld [vmem:[#allocation2] sm:$0x1]
    %v52 = vmul.f32 %v51, 0.0625
    %v53 = vld [vmem:[#allocation3] sm:$0x1]
    %v54 = vmul.f32 %v53, 0.0625
    %v55 = vmul.f32 %v52, %v52
    %v56 = vsub.f32 %v54, %v55
    %v57 = vmax.f32 %v56, 0.0
    %v58 = vld [vmem:[%s1] sm:$0x1]
    %v59 = vadd.f32 %v57, 1e-05
    %v60 = vrsqrt.pop %v59
    %v61 = vmul.f32 %v58, %v60
    %62 = vst [vmem:[%s3] sm:$0x1] %v61
    %v63 = vld [vmem:[%s2] sm:$0x1]
    %v64 = vmul.f32 %v52, %v61
    %v65 = vsub.f32 %v63, %v64
    %66 = vst [vmem:[%s4] sm:$0x1] %v65
    %67 = vst [vmem:[%s5] sm:$0x1] %v52
    %68 = vst [vmem:[%s6] sm:$0x1] %v57
  $region21: #{batchnorm1d.2} parent=0 // pred_fallthru
    _
  // Predicated region
  $region22: #{batchnorm1d.2} parent=0 // pred_check
    _
  $region23: #{batchnorm1d.2} parent=0 // pred_check_branch
    %70 = sbr.rel (0) target = $region25
  $region24: #{batchnorm1d.2} parent=0 // pred_region
    _
  $region25: #{batchnorm1d.2} parent=0 // pred_fallthru
    _
  // Predicated region
  $region26: #{batchnorm1d.2} parent=0 // pred_check
    _
  $region27: #{batchnorm1d.2} parent=0 // pred_check_branch
    %72 = sbr.rel (0) target = $region29
  $region28: #{batchnorm1d.2} parent=0 // pred_region
    _
  $region29: #{batchnorm1d.2} parent=0 // pred_fallthru
    _
  // Predicated region
  $region30: #{batchnorm1d.2} parent=0 // pred_check
    _
  $region31: #{batchnorm1d.2} parent=0 // pred_check_branch
    %74 = sbr.rel (0) target = $region33
  $region32: #{batchnorm1d.2} parent=0 // pred_region
    _
  $region33: #{batchnorm1d.2} parent=0 // pred_fallthru
    _
  // Predicated region
  $region34: #{batchnorm1d.2} parent=0 // pred_check
    _
  $region35: #{batchnorm1d.2} parent=0 // pred_check_branch
    %76 = sbr.rel (0) target = $region37
  $region36: #{batchnorm1d.2} parent=0 // pred_region
    _
  $region37: #{batchnorm1d.2} parent=0 // pred_fallthru
    _
  // Predicated region
  $region38: #{batchnorm1d.2} parent=0 // pred_check
    _
  $region39: #{batchnorm1d.2} parent=0 // pred_check_branch
    %78 = sbr.rel (0) target = $region41
  $region40: #{batchnorm1d.2} parent=0 // pred_region
    _
  $region41: #{batchnorm1d.2} parent=0 // pred_fallthru
    _
  // Predicated region
  $region42: #{batchnorm1d.2} parent=0 // pred_check
    _
  $region43: #{batchnorm1d.2} parent=0 // pred_check_branch
    %80 = sbr.rel (0) target = $region45
  $region44: #{batchnorm1d.2} parent=0 // pred_region
    _
  $region45: #{batchnorm1d.2} parent=0 // pred_fallthru
    _
  // Predicated region
  $region46: #{batchnorm1d.2} parent=0 // pred_check
    _
  $region47: #{batchnorm1d.2} parent=0 // pred_check_branch
    %82 = sbr.rel (0) target = $region49
  $region48: #{batchnorm1d.2} parent=0 // pred_region
    _
  $region49: #{batchnorm1d.2} parent=0 // pred_fallthru
    _
  // Predicated region
  $region50: #{batchnorm1d.2} parent=0 // pred_check
    _
  $region51: #{batchnorm1d.2} parent=0 // pred_check_branch
    %84 = sbr.rel (0) target = $region53
  $region52: #{batchnorm1d.2} parent=0 // pred_region
    _
  $region53: #{batchnorm1d.2} parent=0 // pred_fallthru
    _

// kernel: batchnorm1d.3
$region0: #{batchnorm1d.3}
  #allocation0 [shape = 'u32[]', space=smem, size = 0x4, offset = 0x4, fixed_abs, tag = 'smem constant byte address 0x4 - core index']
  #allocation1 [shape = 'u32[144,128]{1,0:T(1,128)}', space=vmem, size = 0x12000, scoped, tag = 'internal scratch']
  %s0 = inlined_call_operand.vmem [shape: f32[16,128], index: 0, kind: input, shape index: {}]
  %s1 = inlined_call_operand.vmem [shape: f32[1,128], index: 1, kind: input, shape index: {}]
  %s2 = inlined_call_operand.vmem [shape: f32[1,128], index: 2, kind: input, shape index: {}]
  %s3 = inlined_call_operand.hbm [shape: f32[16,128], index: 3, kind: output, shape index: {}]
  %s4 = sld [smem:[#allocation0]]
  $region22: #{batchnorm1d.3} parent=0
    _
  %s6 = ssub.s32 1, %s4
  %s7 = scalar_select 0, %s6, %s4
  $region1: #{batchnorm1d.3} parent=0
    #allocation2 [shape = 'u8[8192]{0}', space=vmem, size = 0x2000, scoped, tag = 'output window, operand 0, single buffered']
    #allocation3 [shape = 's32[1]{0}', space=sflag, size = 0x4, scoped, tag = 'scoped memory for batchnorm1d.3']
    %8 = vsyncpa [#allocation3], 0
    // Predicated region
    $region2: #{batchnorm1d.3} parent=1 // pred_check
      _
    $region3: #{batchnorm1d.3} parent=1 // pred_check_branch
      %10 = sbr.rel (0) target = $region5
    $region4: #{batchnorm1d.3} parent=1 // pred_region
      _
    $region5: #{batchnorm1d.3} parent=1 // pred_fallthru
      _
    // Predicated region
    $region6: #{batchnorm1d.3} parent=1 // pred_check
      _
    $region7: #{batchnorm1d.3} parent=1 // pred_check_branch
      %12 = sbr.rel (0) target = $region9
    $region8: #{batchnorm1d.3} parent=1 // pred_region
      _
    $region9: #{batchnorm1d.3} parent=1 // pred_fallthru
      _
    // Predicated region
    $region10: #{batchnorm1d.3} parent=1 // pred_check
      _
    $region11: #{batchnorm1d.3} parent=1 // pred_check_branch
      %14 = sbr.rel (0) target = $region13
    $region12: #{batchnorm1d.3} parent=1 // pred_region
      _
    $region13: #{batchnorm1d.3} parent=1 // pred_fallthru
      _
    %v15 = vld [vmem:[%s0] sm:$0xff]
    %v16 = vld [vmem:[%s0 + $0x8] sm:$0xff]
    %v17 = vld [vmem:[%s1] sm:$0x1]
    %v19 = vlaneseq
    %v20 = vshrl.u32 %v19, 7
    %v21 = vsub.s32 0, %v20
    %v22 = vrot.slane %v17, %v21
    %v24 = vmul.f32 %v15, %v22
    %v25 = vmul.f32 %v16, %v22
    %v26 = vld [vmem:[%s2] sm:$0x1]
    %v28 = vlaneseq
    %v29 = vshrl.u32 %v28, 7
    %v30 = vsub.s32 0, %v29
    %v31 = vrot.slane %v26, %v30
    %v33 = vadd.f32 %v24, %v31
    %v34 = vadd.f32 %v25, %v31
    %35 = vst [vmem:[#allocation2] sm:$0xff] %v33
    %36 = vst [vmem:[#allocation2 + $0x8] sm:$0xff] %v34
    // Predicated region
    $region14: #{batchnorm1d.3} parent=1 // pred_check
      _
    $region15: #{batchnorm1d.3} parent=1 // pred_check_branch
      %38 = sbr.rel (0) target = $region17
    $region16: #{batchnorm1d.3} parent=1 // pred_region
      %s40 = ssub.s32 256, 256
      %41 = vsyncadd [#allocation3], %s40
      %s42 = sshll.u32 [#allocation2], 4
      %s43 = int_to_ptr.vmem [resolvable:$true] %s42
      %48 = dma.vmem_to_hbm [thread:$0]  %s43, 256, %s3, [#allocation3], 128, 128, 8
    $region17: #{batchnorm1d.3} parent=1 // pred_fallthru
      _
    // Predicated region
    $region18: #{batchnorm1d.3} parent=1 // pred_check
      _
    $region19: #{batchnorm1d.3} parent=1 // pred_check_branch
      %50 = sbr.rel (0) target = $region21
    $region20: #{batchnorm1d.3} parent=1 // pred_region
      %51 = dma.done [#allocation3], 256
    $region21: #{batchnorm1d.3} parent=1 // pred_fallthru
      _
    %52 = vsyncpa [#allocation3], 1

</llo_original>
